<compile_context>
chip_gen: v5e
topology: v5e:2x2
jax: 0.10.0
libtpu: 0.0.40
codegen_flags: <defaults>
</compile_context>

<pallas_src>
import functools

import jax
import jax.numpy as jnp
from jax import lax
from jax.experimental import pallas as pl
from jax.experimental.pallas import tpu as pltpu

LANE = 128      # vreg lane width (last dim of every block)
TM_MAX = 2048   # max rows per block: (2048, 128) f32 tile = 1 MiB per input
NCORES = 2      # shard row range across up to 2 TensorCores (v7x); no-op on 1-TC chips


def _round_up(x, mult):
    return ((x + mult - 1) // mult) * mult


def _mse_kernel(xr_ref, x_ref, out_ref, acc_ref, *, m_rows, tm, needs_mask):
    """Accumulate sum((xr - x)^2) over this core's row range.

    grid = (cores, row_tiles_per_core).  acc_ref is a per-core (tm, 128) f32
    VMEM accumulator; out_ref is this core's (8, 128) partial-sum slab,
    written once on the core's last step.
    """
    c = pl.program_id(0)
    i = pl.program_id(1)
    tiles_per_core = pl.num_programs(1)

    @pl.when(i == 0)
    def _():
        acc_ref[...] = jnp.zeros_like(acc_ref)

    d = xr_ref[...].astype(jnp.float32) - x_ref[...].astype(jnp.float32)

    if needs_mask:
        # Row-validity mask: the tail tile may extend past m_rows, and a core's
        # trailing (index-clamped, duplicated) tiles start at row >= m_rows.
        row0 = (c * tiles_per_core + i) * tm
        rows = row0 + lax.broadcasted_iota(jnp.int32, (tm, 1), 0)
        valid = rows < m_rows
        d = jnp.where(valid, d, 0.0)      # where (not mul) so OOB garbage/NaN -> 0

    acc_ref[...] += d * d

    @pl.when(i == tiles_per_core - 1)
    def _():
        # Fold (tm, 128) accumulator down to an (8, 128) lane-dense slab; the
        # final tiny reduction happens in the wrapper.
        out_ref[...] = jnp.sum(acc_ref[...].reshape(tm // 8, 8, LANE), axis=0)


def custom_loss(x_recon, x, mu, logvar):
    """Pallas equivalent of customLoss.forward: MSE(reduction='sum') + KLD."""
    assert x_recon.shape == x.shape
    assert mu.shape == logvar.shape

    xr = x_recon.reshape(-1)
    xx = x.reshape(-1)
    n = xr.shape[0]

    # Only pad (whole-array copy) in the rare case where n is not a multiple
    # of the lane width; padded positions are zero in BOTH arrays -> 0 contrib.
    if n % LANE != 0:
        pad = LANE - n % LANE
        xr = jnp.pad(xr, (0, pad))
        xx = jnp.pad(xx, (0, pad))

    m_rows = xr.shape[0] // LANE
    xr2 = xr.reshape(m_rows, LANE)   # copy-free reshape, native dtype
    xx2 = xx.reshape(m_rows, LANE)

    # Sublane granularity depends on dtype packing (f32: 8, bf16: 16, int8: 32).
    itemsize = jnp.dtype(xr2.dtype).itemsize
    sub = 8 * max(1, 4 // itemsize)
    tm = min(TM_MAX, _round_up(m_rows, sub))

    tiles_total = pl.cdiv(m_rows, tm)
    ncores = min(NCORES, tiles_total)
    tiles_per_core = pl.cdiv(tiles_total, ncores)

    # Mask only needed if the tail tile is partial or a core gets clamped
    # (duplicated) tiles; statically drop the mask code otherwise.
    needs_mask = (m_rows % tm != 0) or (tiles_total % ncores != 0)

    def row_block(c, i):
        # Clamp so a core's out-of-range (duplicated) tiles stay in bounds;
        # the kernel masks their rows to zero.
        return (jnp.minimum(c * tiles_per_core + i, tiles_total - 1), 0)

    kernel = functools.partial(
        _mse_kernel, m_rows=m_rows, tm=tm, needs_mask=needs_mask)

    bytes_per_in = xr2.size * itemsize
    cost = pl.CostEstimate(
        flops=3 * xr2.size,
        transcendentals=0,
        bytes_accessed=2 * bytes_per_in + ncores * 8 * LANE * 4,
    )

    partial_sums = pl.pallas_call(
        kernel,
        out_shape=jax.ShapeDtypeStruct((ncores * 8, LANE), jnp.float32),
        grid_spec=pltpu.PrefetchScalarGridSpec(
            num_scalar_prefetch=0,
            grid=(ncores, tiles_per_core),
            in_specs=[
                pl.BlockSpec((tm, LANE), row_block),    # x_recon tile (native dtype)
                pl.BlockSpec((tm, LANE), row_block),    # x tile (native dtype)
            ],
            out_specs=pl.BlockSpec((8, LANE), lambda c, i: (c, 0)),
            scratch_shapes=[pltpu.VMEM((tm, LANE), jnp.float32)],
        ),
        compiler_params=pltpu.CompilerParams(
            dimension_semantics=("parallel", "arbitrary"),
        ),
        cost_estimate=cost,
    )(xr2, xx2)

    mse = jnp.sum(partial_sums)

    # KLD over the tiny [B, LATENT] tensors: left to XLA (per perf review) so
    # the Pallas kernel stays a pure streaming reduction.
    mu32 = mu.astype(jnp.float32)
    lv32 = logvar.astype(jnp.float32)
    kld = -0.5 * jnp.sum(1.0 + lv32 - mu32 * mu32 - jnp.exp(lv32))
    return mse + kld


def _reference_loss(x_recon, x, mu, logvar):
    mse = jnp.sum((x_recon.astype(jnp.float32) - x.astype(jnp.float32)) ** 2)
    mu32 = mu.astype(jnp.float32)
    lv32 = logvar.astype(jnp.float32)
    kld = -0.5 * jnp.sum(1.0 + lv32 - mu32 * mu32 - jnp.exp(lv32))
    return mse + kld


def _check(shape, latent, keys, dtype=jnp.float32):
    k1, k2, k3, k4 = keys
    b = shape[0]
    x_recon = jax.random.normal(k1, shape, dtype=jnp.float32).astype(dtype)
    x = jax.random.normal(k2, shape, dtype=jnp.float32).astype(dtype)
    mu = jax.random.normal(k3, (b, latent), dtype=jnp.float32)
    logvar = 0.1 * jax.random.normal(k4, (b, latent), dtype=jnp.float32)

    loss = jax.block_until_ready(custom_loss(x_recon, x, mu, logvar))
    ref = _reference_loss(x_recon, x, mu, logvar)
    assert jnp.allclose(loss, ref, rtol=1e-4, atol=1e-2), (shape, dtype, loss, ref)


if __name__ == "__main__":
    key = jax.random.PRNGKey(0)

    # primary case from the module spec: [B, C, H, W] = [2, 4, 16, 16]
    _check((2, 4, 16, 16), 32, jax.random.split(key, 4))

    # tail-masking case: 1536 elems -> 12 rows (not a multiple of 8)
    _check((2, 3, 16, 16), 32, jax.random.split(jax.random.PRNGKey(1), 4))

    # multi-tile / two-core split with a partial last tile (exercises masking)
    _check((12, 4, 64, 128), 32, jax.random.split(jax.random.PRNGKey(2), 4))

    # bf16 inputs consumed in native dtype (upcast inside the kernel)
    _check((2, 4, 16, 16), 32, jax.random.split(jax.random.PRNGKey(3), 4),
           dtype=jnp.bfloat16)

    print("KERNEL_OK")
</pallas_src>

<mosaic_0001>
module attributes {stable_mosaic.version = 11 : i64} {
  func.func @_mse_kernel(%arg0: i32, %arg1: i32, %arg2: memref<16x128xf32, #tpu.memory_space<vmem>>, %arg3: memref<16x128xf32, #tpu.memory_space<vmem>>, %arg4: memref<8x128xf32, #tpu.memory_space<vmem>>, %arg5: memref<16x128xf32, #tpu.memory_space<vmem>>) attributes {dimension_semantics = [#tpu.dimension_semantics<parallel>, #tpu.dimension_semantics<arbitrary>], iteration_bounds = array<i64: 1, 1>, scalar_prefetch = 0 : i64, scratch_operands = 1 : i64, tpu.core_type = #tpu.core_type<tc>, window_params = [{transform_indices = @transform_0, window_bounds = array<i64: 16, 128>}, {transform_indices = @transform_1, window_bounds = array<i64: 16, 128>}, {transform_indices = @transform_2, window_bounds = array<i64: 8, 128>}]} {
    %c0_i32 = arith.constant 0 : i32
    %0 = arith.cmpi eq, %arg1, %c0_i32 : i32
    %1 = arith.extui %0 : i1 to i32
    %c0_i32_0 = arith.constant 0 : i32
    %2 = arith.cmpi ne, %1, %c0_i32_0 : i32
    scf.if %2 {
      %cst = arith.constant 0.000000e+00 : f32
      %13 = vector.broadcast %cst : f32 to vector<16x128xf32>
      %c0_10 = arith.constant 0 : index
      %c0_11 = arith.constant 0 : index
      %14 = vector.load %arg5[%c0_10, %c0_11] : memref<16x128xf32, #tpu.memory_space<vmem>>, vector<16x128xf32>
      tpu.vector_store %arg5[%c0_10, %c0_11], %13 {strides = array<i32>} : memref<16x128xf32, #tpu.memory_space<vmem>>, vector<16x128xf32>,
    } else {
    }
    %c0 = arith.constant 0 : index
    %c0_1 = arith.constant 0 : index
    %3 = vector.load %arg2[%c0, %c0_1] : memref<16x128xf32, #tpu.memory_space<vmem>>, vector<16x128xf32>
    %c0_2 = arith.constant 0 : index
    %c0_3 = arith.constant 0 : index
    %4 = vector.load %arg3[%c0_2, %c0_3] : memref<16x128xf32, #tpu.memory_space<vmem>>, vector<16x128xf32>
    %5 = arith.subf %3, %4 : vector<16x128xf32>
    %c0_4 = arith.constant 0 : index
    %c0_5 = arith.constant 0 : index
    %6 = vector.load %arg5[%c0_4, %c0_5] : memref<16x128xf32, #tpu.memory_space<vmem>>, vector<16x128xf32>
    %7 = arith.mulf %5, %5 : vector<16x128xf32>
    %8 = arith.addf %6, %7 : vector<16x128xf32>
    %c0_6 = arith.constant 0 : index
    %c0_7 = arith.constant 0 : index
    %9 = vector.load %arg5[%c0_6, %c0_7] : memref<16x128xf32, #tpu.memory_space<vmem>>, vector<16x128xf32>
    tpu.vector_store %arg5[%c0_6, %c0_7], %8 {strides = array<i32>} : memref<16x128xf32, #tpu.memory_space<vmem>>, vector<16x128xf32>,
    %c0_i32_8 = arith.constant 0 : i32
    %10 = arith.cmpi eq, %arg1, %c0_i32_8 : i32
    %11 = arith.extui %10 : i1 to i32
    %c0_i32_9 = arith.constant 0 : i32
    %12 = arith.cmpi ne, %11, %c0_i32_9 : i32
    scf.if %12 {
      %c0_10 = arith.constant 0 : index
      %c0_11 = arith.constant 0 : index
      %13 = vector.load %arg5[%c0_10, %c0_11] : memref<16x128xf32, #tpu.memory_space<vmem>>, vector<16x128xf32>
      %14 = vector.shape_cast %13 : vector<16x128xf32> to vector<2x8x128xf32>
      %cst = arith.constant dense<0.000000e+00> : vector<8x128xf32>
      %15 = vector.multi_reduction <add>, %14, %cst [0] : vector<2x8x128xf32> to vector<8x128xf32>
      %c0_12 = arith.constant 0 : index
      %c0_13 = arith.constant 0 : index
      %16 = vector.load %arg4[%c0_12, %c0_13] : memref<8x128xf32, #tpu.memory_space<vmem>>, vector<8x128xf32>
      tpu.vector_store %arg4[%c0_12, %c0_13], %15 {strides = array<i32>} : memref<8x128xf32, #tpu.memory_space<vmem>>, vector<8x128xf32>,
    } else {
    }
    return
  }
  func.func @transform_0(%arg0: i32, %arg1: i32) -> (i32, i32) {
    %c1_i32 = arith.constant 1 : i32
    %0 = arith.muli %arg0, %c1_i32 : i32
    %1 = arith.addi %0, %arg1 : i32
    %c0_i32 = arith.constant 0 : i32
    %2 = arith.minsi %1, %c0_i32 : i32
    %c0_i32_0 = arith.constant 0 : i32
    %c0_i32_1 = arith.constant 0 : i32
    return %2, %c0_i32_0 : i32, i32
  }
  func.func @transform_1(%arg0: i32, %arg1: i32) -> (i32, i32) {
    %c1_i32 = arith.constant 1 : i32
    %0 = arith.muli %arg0, %c1_i32 : i32
    %1 = arith.addi %0, %arg1 : i32
    %c0_i32 = arith.constant 0 : i32
    %2 = arith.minsi %1, %c0_i32 : i32
    %c0_i32_0 = arith.constant 0 : i32
    %c0_i32_1 = arith.constant 0 : i32
    return %2, %c0_i32_0 : i32, i32
  }
  func.func @transform_2(%arg0: i32, %arg1: i32) -> (i32, i32) {
    %c0_i32 = arith.constant 0 : i32
    %c0_i32_0 = arith.constant 0 : i32
    return %arg0, %c0_i32 : i32, i32
  }
}

</mosaic_0001>

<llo_original>
// kernel: tpu_custom_call.1
$region0: #{tpu_custom_call.1}
  #allocation0 [shape = 'u32[]', space=smem, size = 0x4, offset = 0x4, fixed_abs, tag = 'smem constant byte address 0x4 - core index']
  #allocation1 [shape = 'u32[72,128]{1,0:T(1,128)}', space=vmem, size = 0x9000, scoped, tag = 'internal scratch']
  #allocation2 [shape = 'f32[16,128]{1,0:T(8,128)}', space=vmem, size = 0x2000, scoped, tag = 'scratch operand']
  %s0 = inlined_call_operand.hbm [shape: f32[16,128], index: 0, kind: input, shape index: {}]
  %s1 = inlined_call_operand.hbm [shape: f32[16,128], index: 1, kind: input, shape index: {}]
  %s2 = inlined_call_operand.hbm [shape: f32[8,128], index: 2, kind: output, shape index: {}]
  %s3 = sld [smem:[#allocation0]]
  $region34: #{tpu_custom_call.1} parent=0
    _
  %s5 = ssub.s32 1, %s3
  %s6 = scalar_select 0, %s5, %s3
  $region1: #{tpu_custom_call.1} parent=0
    #allocation3 [shape = 'u8[8192]{0}', space=vmem, size = 0x2000, scoped, tag = 'input window, operand 0, single buffered']
    #allocation4 [shape = 's32[1]{0}', space=sflag, size = 0x4, scoped, tag = 'scoped memory for tpu_custom_call.1']
    #allocation5 [shape = 's32[1]{0}', space=sflag, size = 0x4, scoped, tag = 'scoped memory for tpu_custom_call.1']
    #allocation6 [shape = 'u8[8192]{0}', space=vmem, size = 0x2000, scoped, tag = 'input window, operand 1, single buffered']
    #allocation7 [shape = 's32[1]{0}', space=sflag, size = 0x4, scoped, tag = 'scoped memory for tpu_custom_call.1']
    #allocation8 [shape = 'u8[4096]{0}', space=vmem, size = 0x1000, scoped, tag = 'output window, operand 0, single buffered']
    %7 = vsyncpa [#allocation4], 0
    %8 = vsyncpa [#allocation7], 0
    %9 = vsyncpa [#allocation5], 0
    // Predicated region
    $region2: #{tpu_custom_call.1} parent=1 // pred_check
      _
    $region3: #{tpu_custom_call.1} parent=1 // pred_check_branch
      %11 = sbr.rel (0) target = $region5
    $region4: #{tpu_custom_call.1} parent=1 // pred_region
      %s12 = sadd.s32 0, 0
      %p13 = scmp.lt.s32.totalorder %s12, 0
      %s14 = scalar_select %p13, %s12, 0
      %s15 = smul.u32 2, %s14
      %17 = vsyncadd [#allocation4], 0
      %s18 = smul.addr %s15, 8
      %s19 = scalar_lea.hbm %s0, %s18
      %s20 = sshll.u32 %s19, 4
      %s21 = int_to_ptr.hbm [resolvable:$true] %s20
      %s22 = sshll.u32 [#allocation3], 4
      %s23 = int_to_ptr.vmem [resolvable:$true] %s22
      %28 = dma.hbm_to_vmem [thread:$0]  %s21, 256, %s23, [#allocation4], 128, 128, 8
    $region5: #{tpu_custom_call.1} parent=1 // pred_fallthru
      _
    // Predicated region
    $region6: #{tpu_custom_call.1} parent=1 // pred_check
      _
    $region7: #{tpu_custom_call.1} parent=1 // pred_check_branch
      %30 = sbr.rel (0) target = $region9
    $region8: #{tpu_custom_call.1} parent=1 // pred_region
      %s31 = sadd.s32 0, 0
      %p32 = scmp.lt.s32.totalorder %s31, 0
      %s33 = scalar_select %p32, %s31, 0
      %s34 = smul.u32 2, %s33
      %36 = vsyncadd [#allocation7], 0
      %s37 = smul.addr %s34, 8
      %s38 = scalar_lea.hbm %s1, %s37
      %s39 = sshll.u32 %s38, 4
      %s40 = int_to_ptr.hbm [resolvable:$true] %s39
      %s41 = sshll.u32 [#allocation6], 4
      %s42 = int_to_ptr.vmem [resolvable:$true] %s41
      %47 = dma.hbm_to_vmem [thread:$0]  %s40, 256, %s42, [#allocation7], 128, 128, 8
    $region9: #{tpu_custom_call.1} parent=1 // pred_fallthru
      _
    // Predicated region
    $region10: #{tpu_custom_call.1} parent=1 // pred_check
      _
    $region11: #{tpu_custom_call.1} parent=1 // pred_check_branch
      %49 = sbr.rel (0) target = $region13
    $region12: #{tpu_custom_call.1} parent=1 // pred_region
      %51 = dma.done [#allocation4], 256
    $region13: #{tpu_custom_call.1} parent=1 // pred_fallthru
      _
    // Predicated region
    $region14: #{tpu_custom_call.1} parent=1 // pred_check
      _
    $region15: #{tpu_custom_call.1} parent=1 // pred_check_branch
      %53 = sbr.rel (0) target = $region17
    $region16: #{tpu_custom_call.1} parent=1 // pred_region
      %55 = dma.done [#allocation7], 256
    $region17: #{tpu_custom_call.1} parent=1 // pred_fallthru
      _
    %s56 = sadd.s32 0, 0
    %p57 = scmp.lt.s32.totalorder %s56, 0
    %s58 = scalar_select %p57, %s56, 0
    %s59 = smul.u32 2, %s58
    %s60 = sadd.s32 0, 0
    %p61 = scmp.lt.s32.totalorder %s60, 0
    %s62 = scalar_select %p61, %s60, 0
    %s63 = smul.u32 2, %s62
    %p64 = scmp.eq.s32.totalorder 0, 0
    // Predicated region
    $region18: #{tpu_custom_call.1} parent=1 // pred_check
      %p65 = pneg %p64
    $region19: #{tpu_custom_call.1} parent=1 // pred_check_branch
      %67 = sbr.rel (%p65) target = $region21
    $region20: #{tpu_custom_call.1} parent=1 // pred_region
      %68 = vst [vmem:[#allocation2] sm:$0xff] 0.0
      %69 = vst [vmem:[#allocation2 + $0x8] sm:$0xff] 0.0
    $region21: #{tpu_custom_call.1} parent=1 // pred_fallthru
      _
    %v70 = vld [vmem:[#allocation3] sm:$0xff]
    %v71 = vld [vmem:[#allocation3 + $0x8] sm:$0xff]
    %v72 = vld [vmem:[#allocation6] sm:$0xff]
    %v73 = vld [vmem:[#allocation6 + $0x8] sm:$0xff]
    %v74 = vsub.f32 %v70, %v72
    %v75 = vsub.f32 %v71, %v73
    %v76 = vld [vmem:[#allocation2] sm:$0xff]
    %v77 = vld [vmem:[#allocation2 + $0x8] sm:$0xff]
    %v78 = vmul.f32 %v74, %v74
    %v79 = vmul.f32 %v75, %v75
    %v80 = vadd.f32 %v76, %v78
    %v81 = vadd.f32 %v77, %v79
    %82 = vst [vmem:[#allocation2] sm:$0xff] %v80
    %83 = vst [vmem:[#allocation2 + $0x8] sm:$0xff] %v81
    // Predicated region
    $region22: #{tpu_custom_call.1} parent=1 // pred_check
      %p84 = pneg %p64
    $region23: #{tpu_custom_call.1} parent=1 // pred_check_branch
      %86 = sbr.rel (%p84) target = $region25
    $region24: #{tpu_custom_call.1} parent=1 // pred_region
      %v87 = vld [vmem:[#allocation2] sm:$0xff]
      %v88 = vld [vmem:[#allocation2 + $0x8] sm:$0xff]
      %v89 = vadd.f32 %v87, %v88
      %90 = vst [vmem:[#allocation8] sm:$0xff] %v89
    $region25: #{tpu_custom_call.1} parent=1 // pred_fallthru
      _
    // Predicated region
    $region26: #{tpu_custom_call.1} parent=1 // pred_check
      _
    $region27: #{tpu_custom_call.1} parent=1 // pred_check_branch
      %92 = sbr.rel (0) target = $region29
    $region28: #{tpu_custom_call.1} parent=1 // pred_region
      %94 = vsyncadd [#allocation5], 0
      %s96 = sshll.u32 [#allocation8], 4
      %s97 = int_to_ptr.vmem [resolvable:$true] %s96
      %s98 = sshll.u32 %s2, 4
      %s99 = int_to_ptr.hbm [resolvable:$true] %s98
      %101 = dma.vmem_to_hbm [thread:$0]  %s97, 128, %s99, [#allocation5]
    $region29: #{tpu_custom_call.1} parent=1 // pred_fallthru
      _
    // Predicated region
    $region30: #{tpu_custom_call.1} parent=1 // pred_check
      _
    $region31: #{tpu_custom_call.1} parent=1 // pred_check_branch
      %103 = sbr.rel (0) target = $region33
    $region32: #{tpu_custom_call.1} parent=1 // pred_region
      %105 = dma.done [#allocation5], 128
    $region33: #{tpu_custom_call.1} parent=1 // pred_fallthru
      _
    %106 = vsyncpa [#allocation4], 1
    %107 = vsyncpa [#allocation7], 1
    %108 = vsyncpa [#allocation5], 1

</llo_original>
